<compile_context>
chip_gen: v7x
topology: tpu7x:2x2x1
jax: 0.10.0
libtpu: 0.0.40
codegen_flags: <defaults>
</compile_context>

<pallas_src>
import functools
import numpy as np

import jax
import jax.numpy as jnp
from jax import lax
from jax.experimental import pallas as pl
from jax.experimental.pallas import tpu as pltpu

# Packed label layout (lane axis of lab_row / sublane axis of lab_col).
_GREEN, _RED, _TRANS = 0, 3, 6
_SYM = 9                                   # 1.0 == symmetric instance
_IGREEN, _IRED = 10, 11                    # host-packed inverse rotation norms
_NTRANS, _NFEAT = 12, 13                   # host-packed squared norms
_LANES = 16


def _device_caps():
    """(vec_max_P, big_vmem?) per TPU generation."""
    try:
        kind = jax.devices()[0].device_kind.lower()
    except Exception:                       # pragma: no cover
        kind = ""
    if ("v5" in kind) or ("v6" in kind):
        return 128, True                    # 128 MiB VMEM per core
    return 96, False                        # v7x: 64 MiB per TC / unknown: safe


def _vmem_limit_bytes(P, Dp, vec_path, big_vmem):
    """Scoped-VMEM request sized to the actual footprint, per-chip capped."""
    inputs = 2 * (P * Dp + 2 * P * _LANES) * 4            # double-buffered blocks
    scratch = (1 if vec_path else 3) * P * P * 4
    temps = (3 * P * P * P * 4) if vec_path else (3 * 8 * P * P * 4)
    need = inputs + scratch + temps + (4 << 20)            # + headroom
    cap = (96 << 20) if big_vmem else (32 << 20)
    return int(min(max(need, 16 << 20), cap))


def _class_rank_kernel(s_ref, feat_ref, labr_ref, labc_ref, out_ref, *scratch,
                       temperature, soft_lambda, vec_path):
    c = pl.program_id(0)
    n = s_ref[2 * c]          # valid samples in this class group
    mode = s_ref[2 * c + 1]   # 0: green only, 1: green+red (nonSym), 2: mug

    rot_scr = scratch[0]
    P = feat_ref.shape[1]

    f = feat_ref[0]           # [P, Dp]  zero-padded features
    lr = labr_ref[0]          # [P, 16]  row-oriented labels + norms
    lc = labc_ref[0]          # [16, P]  same data, transposed on the host

    row_i = lax.broadcasted_iota(jnp.int32, (P, P), 0)
    col_i = lax.broadcasted_iota(jnp.int32, (P, P), 1)
    pair_valid = (row_i < n) & (col_i < n) & (row_i != col_i)

    # --- feature similarity: -||f_i - f_j|| / T (gram on MXU, norms prepacked)
    g_f = lax.dot_general(f, f, (((1,), (1,)), ((), ())),
                          preferred_element_type=jnp.float32)
    nf_col = lr[:, _NFEAT:_NFEAT + 1]          # [P,1]
    nf_row = lc[_NFEAT:_NFEAT + 1, :]          # [1,P]
    feat_dist = jnp.sqrt(jnp.maximum(nf_col + nf_row - 2.0 * g_f, 0.0))
    logits = feat_dist * jnp.float32(-1.0 / temperature)

    # --- label distances: 3-wide grams as VPU outer products -----------------
    def vpu_gram(b):
        return (lr[:, b:b + 1] * lc[b:b + 1, :]
                + lr[:, b + 1:b + 2] * lc[b + 1:b + 2, :]
                + lr[:, b + 2:b + 3] * lc[b + 2:b + 3, :])

    def cos_diff(b, inv_idx):
        # 1 - <a_i,a_j> * (1/||a_i||) * (1/||a_j||); inverse norms host-packed,
        # so no sqrt / reciprocal hits the EUP here.
        inv = lr[:, inv_idx:inv_idx + 1] * lc[inv_idx:inv_idx + 1, :]
        return 1.0 - vpu_gram(b) * inv

    cos_g = cos_diff(_GREEN, _IGREEN)          # needed by every mode

    @pl.when(mode == 0)
    def _():
        rot_scr[...] = cos_g

    @pl.when(mode == 1)
    def _():
        rot_scr[...] = 0.5 * (cos_g + cos_diff(_RED, _IRED))

    @pl.when(mode == 2)
    def _():
        cos_r = cos_diff(_RED, _IRED)
        ns_col = 1.0 - lr[:, _SYM:_SYM + 1]    # 1.0 == non-symmetric
        ns_row = 1.0 - lc[_SYM:_SYM + 1, :]
        both_ns = ns_col * ns_row              # VPU outer product
        rot_scr[...] = (1.0 - both_ns) * cos_g + both_ns * 0.5 * (cos_g + cos_r)

    g_t = vpu_gram(_TRANS)
    nt_col = lr[:, _NTRANS:_NTRANS + 1]
    nt_row = lc[_NTRANS:_NTRANS + 1, :]
    trans_dist = jnp.sqrt(jnp.maximum(nt_col + nt_row - 2.0 * g_t, 0.0))
    label_diff = soft_lambda * rot_scr[...] + (1.0 - soft_lambda) * trans_dist

    # --- Rank-N-Contrast ------------------------------------------------------
    neg_big = jnp.float32(-1e30)

    if vec_path:
        # Exact per-row max shift: cancels in pos_logit - log(denom), and keeps
        # the denominator from underflowing for rows far below the global max.
        m_row = jnp.max(jnp.where(pair_valid, logits, neg_big),
                        axis=-1, keepdims=True)
        logits_sh = jnp.minimum(logits - m_row, 0.0)
        exp_l = jnp.where(pair_valid, jnp.exp(logits_sh), 0.0)
        sum_pos = jnp.sum(jnp.where(pair_valid, logits_sh, 0.0))
        # denom[i,j] = sum_k exp_l[i,k] * [label_diff[i,k] >= label_diff[i,j]]
        # Single vselect per element: no bool->f32 convert, no P^3 multiply.
        ge = label_diff[:, None, :] >= label_diff[:, :, None]       # [P,P,P]
        denom = jnp.sum(jnp.where(ge, exp_l[:, None, :], 0.0), axis=-1)
        sum_logden = jnp.sum(jnp.where(pair_valid,
                                       jnp.log(denom + 1e-30), 0.0))
    else:
        # Global max shift keeps exp_logits symmetric, which the transpose-free
        # per-positive reduction below relies on.
        m = jnp.max(jnp.where(pair_valid, logits, neg_big))
        logits_sh = jnp.minimum(logits - m, 0.0)
        exp_l = jnp.where(pair_valid, jnp.exp(logits_sh), 0.0)
        sum_pos = jnp.sum(jnp.where(pair_valid, logits_sh, 0.0))

        ld_scr, e_scr = scratch[1], scratch[2]
        ld_scr[...] = label_diff
        e_scr[...] = exp_l

        # Blocked over 8 positives per iteration: one sublane row of
        # label_diff per step, 8x fewer scratch reloads / loop iterations.
        def body(blk, acc):
            j0 = pl.multiple_of(blk * 8, 8)
            ld_full = ld_scr[...]                          # [P,P]
            e_full = e_scr[...]                            # [P,P]
            ld_blk = ld_scr[pl.ds(j0, 8), :]               # [8,P] rows j0..j0+7
            # geT[jj,k,i] = label_diff[k,i] >= label_diff[j0+jj,i]
            #             = [label_diff[i,k] >= label_diff[i,j]]  (symmetry)
            ge3 = ld_full[None, :, :] >= ld_blk[:, None, :]          # [8,P,P]
            dnm = jnp.sum(jnp.where(ge3, e_full[None, :, :], 0.0),
                          axis=1)                                    # [8,P]
            j_ids = j0 + lax.broadcasted_iota(jnp.int32, (8, P), 0)
            i_ids = lax.broadcasted_iota(jnp.int32, (8, P), 1)
            valid = (i_ids < n) & (j_ids < n) & (i_ids != j_ids)
            return acc + jnp.where(valid, jnp.log(dnm + 1e-30), 0.0)

        acc = lax.fori_loop(0, P // 8, body, jnp.zeros((8, P), jnp.float32))
        sum_logden = jnp.sum(acc)

    total = sum_logden - sum_pos                 # sum over valid pairs of -log_prob
    n_pairs = (n * (n - 1)).astype(jnp.float32)
    loss = total / jnp.maximum(n_pairs, 1.0)
    out_ref[...] = jnp.full((1, 8, 128), loss, jnp.float32)    # lane-dense store


def _class_rank_pallas(scalars, feat, lab_row, lab_col, *,
                       temperature, soft_lambda, vec_path, big_vmem):
    C, P, Dp = feat.shape
    kernel = functools.partial(_class_rank_kernel,
                               temperature=float(temperature),
                               soft_lambda=float(soft_lambda),
                               vec_path=bool(vec_path))
    scratch = [pltpu.VMEM((P, P), jnp.float32)]                 # rot_diff
    if not vec_path:
        scratch += [pltpu.VMEM((P, P), jnp.float32),            # label_diff
                    pltpu.VMEM((P, P), jnp.float32)]            # exp_logits

    grid_spec = pltpu.PrefetchScalarGridSpec(
        num_scalar_prefetch=1,
        grid=(C,),
        in_specs=[
            pl.BlockSpec((1, P, Dp), lambda c, s: (c, 0, 0)),
            pl.BlockSpec((1, P, _LANES), lambda c, s: (c, 0, 0)),
            pl.BlockSpec((1, _LANES, P), lambda c, s: (c, 0, 0)),
        ],
        out_specs=pl.BlockSpec((1, 8, 128), lambda c, s: (c, 0, 0)),
        scratch_shapes=scratch,
    )
    return pl.pallas_call(
        kernel,
        out_shape=jax.ShapeDtypeStruct((C, 8, 128), jnp.float32),
        grid_spec=grid_spec,
        compiler_params=pltpu.CompilerParams(
            # On v7x the class axis is intended to split across the two TCs;
            # if a trace shows it doesn't, switch to an explicit two-core
            # split / pltpu.CORE_PARALLEL.  No effect on v5e/v6e (1 TC).
            dimension_semantics=("parallel",),
            vmem_limit_bytes=_vmem_limit_bytes(P, Dp, vec_path, big_vmem)),
    )(scalars, feat, lab_row, lab_col)


def class_rank_forward(features, labels, gt_green, gt_red, gt_trans, sym,
                       temperature=2.0, soft_lambda=0.8, force_vec=None):
    """JAX/Pallas equivalent of Class_Rank.forward."""
    feat_np = np.asarray(features, np.float32)
    green_np = np.asarray(gt_green, np.float32)
    red_np = np.asarray(gt_red, np.float32)
    trans_np = np.asarray(gt_trans, np.float32)
    labels_np = np.asarray(labels)
    sym_np = np.asarray(sym)

    uniq = np.unique(labels_np)                       # torch.unique(labels)
    C = int(uniq.shape[0])
    groups = [np.where(labels_np == cid)[0] for cid in uniq]

    max_n = max(int(g.shape[0]) for g in groups)
    P = max(8, -(-max_n // 8) * 8)                    # per-group pad, not full bs
    D = feat_np.shape[1]
    Dp = max(128, -(-D // 128) * 128)                 # lane-dense feature block

    feat_packed = np.zeros((C, P, Dp), np.float32)
    lab_row = np.zeros((C, P, _LANES), np.float32)
    scalars = np.zeros((2 * C,), np.int32)

    for c, (cid, ind) in enumerate(zip(uniq, groups)):
        n = int(ind.shape[0])
        feat_packed[c, :n, :D] = feat_np[ind]
        lab_row[c, :n, _GREEN:_GREEN + 3] = green_np[ind]
        lab_row[c, :n, _RED:_RED + 3] = red_np[ind]
        lab_row[c, :n, _TRANS:_TRANS + 3] = trans_np[ind]
        lab_row[c, :n, _SYM] = (sym_np[ind, 0] != 0).astype(np.float32)
        g_nrm = np.linalg.norm(green_np[ind], axis=1)
        r_nrm = np.linalg.norm(red_np[ind], axis=1)
        lab_row[c, :n, _IGREEN] = np.where(
            g_nrm > 0, 1.0 / np.maximum(g_nrm, 1e-12), 0.0)
        lab_row[c, :n, _IRED] = np.where(
            r_nrm > 0, 1.0 / np.maximum(r_nrm, 1e-12), 0.0)
        lab_row[c, :n, _NTRANS] = np.sum(trans_np[ind] ** 2, axis=1)
        lab_row[c, :n, _NFEAT] = np.sum(feat_np[ind] ** 2, axis=1)
        if int(cid) == 5:
            mode = 2                                  # rnc_loss_mug
        elif not np.any(sym_np[ind, 0] == 0):
            mode = 0                                  # rnc_loss (all symmetric)
        else:
            mode = 1                                  # rnc_loss_nonSym
        scalars[2 * c] = n
        scalars[2 * c + 1] = mode

    lab_col = np.ascontiguousarray(np.transpose(lab_row, (0, 2, 1)))  # [C,16,P]

    vec_max_p, big_vmem = _device_caps()
    vec_path = (P <= vec_max_p) if force_vec is None else bool(force_vec)

    per_class = _class_rank_pallas(
        jnp.asarray(scalars), jnp.asarray(feat_packed),
        jnp.asarray(lab_row), jnp.asarray(lab_col),
        temperature=temperature, soft_lambda=soft_lambda,
        vec_path=vec_path, big_vmem=big_vmem)
    return jnp.mean(per_class[:, 0, 0])               # sum over classes / #classes


if __name__ == "__main__":
    key = jax.random.PRNGKey(0)
    bs, D = 8, 32
    k = jax.random.split(key, 4)

    features = jax.random.normal(k[0], (bs, D), jnp.float32)
    gt_green = jax.random.normal(k[1], (bs, 3), jnp.float32)
    gt_green = gt_green / jnp.linalg.norm(gt_green, axis=-1, keepdims=True)
    gt_red = jax.random.normal(k[2], (bs, 3), jnp.float32)
    gt_red = gt_red / jnp.linalg.norm(gt_red, axis=-1, keepdims=True)
    gt_trans = 0.1 * jax.random.normal(k[3], (bs, 3), jnp.float32)

    # class 1: mixed symmetry (nonSym branch), class 5: mug branch,
    # class 2: all symmetric (plain rnc_loss branch).
    labels = jnp.array([1, 1, 1, 5, 5, 2, 2, 2], dtype=jnp.int32)
    sym = jnp.array([[0, 0, 0, 0],
                     [1, 0, 0, 0],
                     [0, 0, 0, 0],
                     [1, 0, 0, 0],
                     [0, 0, 0, 0],
                     [1, 0, 0, 0],
                     [1, 0, 0, 0],
                     [1, 0, 0, 0]], dtype=jnp.int32)

    # Vectorised path (default at this size).
    out_vec = class_rank_forward(features, labels, gt_green, gt_red, gt_trans,
                                 sym, force_vec=True)
    out_vec = jax.block_until_ready(out_vec)
    assert bool(jnp.isfinite(out_vec))

    # Blocked-loop fallback path on the same inputs; must agree.
    out_loop = class_rank_forward(features, labels, gt_green, gt_red, gt_trans,
                                  sym, force_vec=False)
    out_loop = jax.block_until_ready(out_loop)
    assert bool(jnp.isfinite(out_loop))
    assert bool(jnp.allclose(out_vec, out_loop, rtol=1e-4, atol=1e-4)), (
        float(out_vec), float(out_loop))

    print("KERNEL_OK")
</pallas_src>

<mosaic_0001>
module attributes {stable_mosaic.version = 11 : i64} {
  func.func @_class_rank_kernel(%arg0: i32, %arg1: memref<6xi32, #tpu.memory_space<smem>>, %arg2: memref<1x8x128xf32, #tpu.memory_space<vmem>>, %arg3: memref<1x8x16xf32, #tpu.memory_space<vmem>>, %arg4: memref<1x16x8xf32, #tpu.memory_space<vmem>>, %arg5: memref<1x8x128xf32, #tpu.memory_space<vmem>>, %arg6: memref<8x8xf32, #tpu.memory_space<vmem>>) attributes {dimension_semantics = [#tpu.dimension_semantics<parallel>], iteration_bounds = array<i64: 3>, scalar_prefetch = 1 : i64, scratch_operands = 1 : i64, tpu.core_type = #tpu.core_type<tc>, window_params = [{transform_indices = @transform_0, window_bounds = array<i64: 1, 8, 128>}, {transform_indices = @transform_1, window_bounds = array<i64: 1, 8, 16>}, {transform_indices = @transform_2, window_bounds = array<i64: 1, 16, 8>}, {transform_indices = @transform_3, window_bounds = array<i64: 1, 8, 128>}]} {
    %c2_i32 = arith.constant 2 : i32
    %0 = arith.muli %c2_i32, %arg0 : i32
    %1 = arith.index_cast %0 : i32 to index
    %2 = memref.load %arg1[%1] : memref<6xi32, #tpu.memory_space<smem>>
    %c2_i32_0 = arith.constant 2 : i32
    %3 = arith.muli %c2_i32_0, %arg0 : i32
    %c1_i32 = arith.constant 1 : i32
    %4 = arith.addi %3, %c1_i32 : i32
    %5 = arith.index_cast %4 : i32 to index
    %6 = memref.load %arg1[%5] : memref<6xi32, #tpu.memory_space<smem>>
    %c0 = arith.constant 0 : index
    %c0_1 = arith.constant 0 : index
    %c0_2 = arith.constant 0 : index
    %7 = vector.load %arg2[%c0, %c0_1, %c0_2] : memref<1x8x128xf32, #tpu.memory_space<vmem>>, vector<1x8x128xf32>
    %8 = vector.shape_cast %7 : vector<1x8x128xf32> to vector<8x128xf32>
    %c0_3 = arith.constant 0 : index
    %c0_4 = arith.constant 0 : index
    %c0_5 = arith.constant 0 : index
    %9 = vector.load %arg3[%c0_3, %c0_4, %c0_5] : memref<1x8x16xf32, #tpu.memory_space<vmem>>, vector<1x8x16xf32>
    %10 = vector.shape_cast %9 : vector<1x8x16xf32> to vector<8x16xf32>
    %c0_6 = arith.constant 0 : index
    %c0_7 = arith.constant 0 : index
    %c0_8 = arith.constant 0 : index
    %11 = vector.load %arg4[%c0_6, %c0_7, %c0_8] : memref<1x16x8xf32, #tpu.memory_space<vmem>>, vector<1x16x8xf32>
    %12 = vector.shape_cast %11 : vector<1x16x8xf32> to vector<16x8xf32>
    %13 = tpu.iota {dimensions = array<i32: 0>} : vector<8x8xi32>
    %14 = tpu.iota {dimensions = array<i32: 1>} : vector<8x8xi32>
    %15 = vector.broadcast %2 : i32 to vector<8x8xi32>
    %16 = arith.cmpi slt, %13, %15 : vector<8x8xi32>
    %17 = vector.broadcast %2 : i32 to vector<8x8xi32>
    %18 = arith.cmpi slt, %14, %17 : vector<8x8xi32>
    %19 = arith.andi %16, %18 : vector<8x8xi1>
    %20 = arith.cmpi ne, %13, %14 : vector<8x8xi32>
    %21 = arith.andi %19, %20 : vector<8x8xi1>
    %cst = arith.constant dense<0.000000e+00> : vector<8x8xf32>
    %22 = tpu.matmul %8, %8, %cst {dimension_numbers = #tpu.dot_dimension_numbers<[1], [1], [0], [0], [0, 0, 1, 0], [], []>} : vector<8x128xf32>, vector<8x128xf32>, vector<8x8xf32> -> vector<8x8xf32>
    %23 = vector.extract_strided_slice %10 {offsets = [0, 13], sizes = [8, 1], strides = [1, 1]} : vector<8x16xf32> to vector<8x1xf32>
    %24 = vector.extract_strided_slice %12 {offsets = [13, 0], sizes = [1, 8], strides = [1, 1]} : vector<16x8xf32> to vector<1x8xf32>
    %25 = vector.broadcast %23 : vector<8x1xf32> to vector<8x8xf32>
    %26 = vector.broadcast %24 : vector<1x8xf32> to vector<8x8xf32>
    %27 = arith.addf %25, %26 : vector<8x8xf32>
    %cst_9 = arith.constant 2.000000e+00 : f32
    %28 = vector.broadcast %cst_9 : f32 to vector<8x8xf32>
    %29 = arith.mulf %28, %22 : vector<8x8xf32>
    %30 = arith.subf %27, %29 : vector<8x8xf32>
    %cst_10 = arith.constant 0.000000e+00 : f32
    %31 = vector.broadcast %cst_10 : f32 to vector<8x8xf32>
    %32 = arith.maximumf %30, %31 : vector<8x8xf32>
    %33 = math.sqrt %32 : vector<8x8xf32>
    %cst_11 = arith.constant -5.000000e-01 : f32
    %34 = vector.broadcast %cst_11 : f32 to vector<8x8xf32>
    %35 = arith.mulf %33, %34 : vector<8x8xf32>
    %36 = vector.extract_strided_slice %10 {offsets = [0, 10], sizes = [8, 1], strides = [1, 1]} : vector<8x16xf32> to vector<8x1xf32>
    %37 = vector.extract_strided_slice %12 {offsets = [10, 0], sizes = [1, 8], strides = [1, 1]} : vector<16x8xf32> to vector<1x8xf32>
    %38 = vector.broadcast %36 : vector<8x1xf32> to vector<8x8xf32>
    %39 = vector.broadcast %37 : vector<1x8xf32> to vector<8x8xf32>
    %40 = arith.mulf %38, %39 : vector<8x8xf32>
    %41 = vector.extract_strided_slice %10 {offsets = [0, 0], sizes = [8, 1], strides = [1, 1]} : vector<8x16xf32> to vector<8x1xf32>
    %42 = vector.extract_strided_slice %12 {offsets = [0, 0], sizes = [1, 8], strides = [1, 1]} : vector<16x8xf32> to vector<1x8xf32>
    %43 = vector.broadcast %41 : vector<8x1xf32> to vector<8x8xf32>
    %44 = vector.broadcast %42 : vector<1x8xf32> to vector<8x8xf32>
    %45 = arith.mulf %43, %44 : vector<8x8xf32>
    %46 = vector.extract_strided_slice %10 {offsets = [0, 1], sizes = [8, 1], strides = [1, 1]} : vector<8x16xf32> to vector<8x1xf32>
    %47 = vector.extract_strided_slice %12 {offsets = [1, 0], sizes = [1, 8], strides = [1, 1]} : vector<16x8xf32> to vector<1x8xf32>
    %48 = vector.broadcast %46 : vector<8x1xf32> to vector<8x8xf32>
    %49 = vector.broadcast %47 : vector<1x8xf32> to vector<8x8xf32>
    %50 = arith.mulf %48, %49 : vector<8x8xf32>
    %51 = arith.addf %45, %50 : vector<8x8xf32>
    %52 = vector.extract_strided_slice %10 {offsets = [0, 2], sizes = [8, 1], strides = [1, 1]} : vector<8x16xf32> to vector<8x1xf32>
    %53 = vector.extract_strided_slice %12 {offsets = [2, 0], sizes = [1, 8], strides = [1, 1]} : vector<16x8xf32> to vector<1x8xf32>
    %54 = vector.broadcast %52 : vector<8x1xf32> to vector<8x8xf32>
    %55 = vector.broadcast %53 : vector<1x8xf32> to vector<8x8xf32>
    %56 = arith.mulf %54, %55 : vector<8x8xf32>
    %57 = arith.addf %51, %56 : vector<8x8xf32>
    %58 = arith.mulf %57, %40 : vector<8x8xf32>
    %cst_12 = arith.constant 1.000000e+00 : f32
    %59 = vector.broadcast %cst_12 : f32 to vector<8x8xf32>
    %60 = arith.subf %59, %58 : vector<8x8xf32>
    %c0_i32 = arith.constant 0 : i32
    %61 = arith.cmpi eq, %6, %c0_i32 : i32
    %62 = arith.extui %61 : i1 to i32
    %c0_i32_13 = arith.constant 0 : i32
    %63 = arith.cmpi ne, %62, %c0_i32_13 : i32
    scf.if %63 {
      %c0_40 = arith.constant 0 : index
      %c0_41 = arith.constant 0 : index
      %149 = vector.load %arg6[%c0_40, %c0_41] : memref<8x8xf32, #tpu.memory_space<vmem>>, vector<8x8xf32>
      tpu.vector_store %arg6[%c0_40, %c0_41], %60 {strides = array<i32>} : memref<8x8xf32, #tpu.memory_space<vmem>>, vector<8x8xf32>,
    } else {
    }
    %c1_i32_14 = arith.constant 1 : i32
    %64 = arith.cmpi eq, %6, %c1_i32_14 : i32
    %65 = arith.extui %64 : i1 to i32
    %c0_i32_15 = arith.constant 0 : i32
    %66 = arith.cmpi ne, %65, %c0_i32_15 : i32
    scf.if %66 {
      %149 = vector.extract_strided_slice %10 {offsets = [0, 11], sizes = [8, 1], strides = [1, 1]} : vector<8x16xf32> to vector<8x1xf32>
      %150 = vector.extract_strided_slice %12 {offsets = [11, 0], sizes = [1, 8], strides = [1, 1]} : vector<16x8xf32> to vector<1x8xf32>
      %151 = vector.broadcast %149 : vector<8x1xf32> to vector<8x8xf32>
      %152 = vector.broadcast %150 : vector<1x8xf32> to vector<8x8xf32>
      %153 = arith.mulf %151, %152 : vector<8x8xf32>
      %154 = vector.extract_strided_slice %10 {offsets = [0, 3], sizes = [8, 1], strides = [1, 1]} : vector<8x16xf32> to vector<8x1xf32>
      %155 = vector.extract_strided_slice %12 {offsets = [3, 0], sizes = [1, 8], strides = [1, 1]} : vector<16x8xf32> to vector<1x8xf32>
      %156 = vector.broadcast %154 : vector<8x1xf32> to vector<8x8xf32>
      %157 = vector.broadcast %155 : vector<1x8xf32> to vector<8x8xf32>
      %158 = arith.mulf %156, %157 : vector<8x8xf32>
      %159 = vector.extract_strided_slice %10 {offsets = [0, 4], sizes = [8, 1], strides = [1, 1]} : vector<8x16xf32> to vector<8x1xf32>
      %160 = vector.extract_strided_slice %12 {offsets = [4, 0], sizes = [1, 8], strides = [1, 1]} : vector<16x8xf32> to vector<1x8xf32>
      %161 = vector.broadcast %159 : vector<8x1xf32> to vector<8x8xf32>
      %162 = vector.broadcast %160 : vector<1x8xf32> to vector<8x8xf32>
      %163 = arith.mulf %161, %162 : vector<8x8xf32>
      %164 = arith.addf %158, %163 : vector<8x8xf32>
      %165 = vector.extract_strided_slice %10 {offsets = [0, 5], sizes = [8, 1], strides = [1, 1]} : vector<8x16xf32> to vector<8x1xf32>
      %166 = vector.extract_strided_slice %12 {offsets = [5, 0], sizes = [1, 8], strides = [1, 1]} : vector<16x8xf32> to vector<1x8xf32>
      %167 = vector.broadcast %165 : vector<8x1xf32> to vector<8x8xf32>
      %168 = vector.broadcast %166 : vector<1x8xf32> to vector<8x8xf32>
      %169 = arith.mulf %167, %168 : vector<8x8xf32>
      %170 = arith.addf %164, %169 : vector<8x8xf32>
      %171 = arith.mulf %170, %153 : vector<8x8xf32>
      %cst_40 = arith.constant 1.000000e+00 : f32
      %172 = vector.broadcast %cst_40 : f32 to vector<8x8xf32>
      %173 = arith.subf %172, %171 : vector<8x8xf32>
      %174 = arith.addf %60, %173 : vector<8x8xf32>
      %cst_41 = arith.constant 5.000000e-01 : f32
      %175 = vector.broadcast %cst_41 : f32 to vector<8x8xf32>
      %176 = arith.mulf %175, %174 : vector<8x8xf32>
      %c0_42 = arith.constant 0 : index
      %c0_43 = arith.constant 0 : index
      %177 = vector.load %arg6[%c0_42, %c0_43] : memref<8x8xf32, #tpu.memory_space<vmem>>, vector<8x8xf32>
      tpu.vector_store %arg6[%c0_42, %c0_43], %176 {strides = array<i32>} : memref<8x8xf32, #tpu.memory_space<vmem>>, vector<8x8xf32>,
    } else {
    }
    %c2_i32_16 = arith.constant 2 : i32
    %67 = arith.cmpi eq, %6, %c2_i32_16 : i32
    %68 = arith.extui %67 : i1 to i32
    %c0_i32_17 = arith.constant 0 : i32
    %69 = arith.cmpi ne, %68, %c0_i32_17 : i32
    scf.if %69 {
      %149 = vector.extract_strided_slice %10 {offsets = [0, 11], sizes = [8, 1], strides = [1, 1]} : vector<8x16xf32> to vector<8x1xf32>
      %150 = vector.extract_strided_slice %12 {offsets = [11, 0], sizes = [1, 8], strides = [1, 1]} : vector<16x8xf32> to vector<1x8xf32>
      %151 = vector.broadcast %149 : vector<8x1xf32> to vector<8x8xf32>
      %152 = vector.broadcast %150 : vector<1x8xf32> to vector<8x8xf32>
      %153 = arith.mulf %151, %152 : vector<8x8xf32>
      %154 = vector.extract_strided_slice %10 {offsets = [0, 3], sizes = [8, 1], strides = [1, 1]} : vector<8x16xf32> to vector<8x1xf32>
      %155 = vector.extract_strided_slice %12 {offsets = [3, 0], sizes = [1, 8], strides = [1, 1]} : vector<16x8xf32> to vector<1x8xf32>
      %156 = vector.broadcast %154 : vector<8x1xf32> to vector<8x8xf32>
      %157 = vector.broadcast %155 : vector<1x8xf32> to vector<8x8xf32>
      %158 = arith.mulf %156, %157 : vector<8x8xf32>
      %159 = vector.extract_strided_slice %10 {offsets = [0, 4], sizes = [8, 1], strides = [1, 1]} : vector<8x16xf32> to vector<8x1xf32>
      %160 = vector.extract_strided_slice %12 {offsets = [4, 0], sizes = [1, 8], strides = [1, 1]} : vector<16x8xf32> to vector<1x8xf32>
      %161 = vector.broadcast %159 : vector<8x1xf32> to vector<8x8xf32>
      %162 = vector.broadcast %160 : vector<1x8xf32> to vector<8x8xf32>
      %163 = arith.mulf %161, %162 : vector<8x8xf32>
      %164 = arith.addf %158, %163 : vector<8x8xf32>
      %165 = vector.extract_strided_slice %10 {offsets = [0, 5], sizes = [8, 1], strides = [1, 1]} : vector<8x16xf32> to vector<8x1xf32>
      %166 = vector.extract_strided_slice %12 {offsets = [5, 0], sizes = [1, 8], strides = [1, 1]} : vector<16x8xf32> to vector<1x8xf32>
      %167 = vector.broadcast %165 : vector<8x1xf32> to vector<8x8xf32>
      %168 = vector.broadcast %166 : vector<1x8xf32> to vector<8x8xf32>
      %169 = arith.mulf %167, %168 : vector<8x8xf32>
      %170 = arith.addf %164, %169 : vector<8x8xf32>
      %171 = arith.mulf %170, %153 : vector<8x8xf32>
      %cst_40 = arith.constant 1.000000e+00 : f32
      %172 = vector.broadcast %cst_40 : f32 to vector<8x8xf32>
      %173 = arith.subf %172, %171 : vector<8x8xf32>
      %174 = vector.extract_strided_slice %10 {offsets = [0, 9], sizes = [8, 1], strides = [1, 1]} : vector<8x16xf32> to vector<8x1xf32>
      %cst_41 = arith.constant 1.000000e+00 : f32
      %175 = vector.broadcast %cst_41 : f32 to vector<8x1xf32>
      %176 = arith.subf %175, %174 : vector<8x1xf32>
      %177 = vector.extract_strided_slice %12 {offsets = [9, 0], sizes = [1, 8], strides = [1, 1]} : vector<16x8xf32> to vector<1x8xf32>
      %cst_42 = arith.constant 1.000000e+00 : f32
      %178 = vector.broadcast %cst_42 : f32 to vector<1x8xf32>
      %179 = arith.subf %178, %177 : vector<1x8xf32>
      %180 = vector.broadcast %176 : vector<8x1xf32> to vector<8x8xf32>
      %181 = vector.broadcast %179 : vector<1x8xf32> to vector<8x8xf32>
      %182 = arith.mulf %180, %181 : vector<8x8xf32>
      %cst_43 = arith.constant 1.000000e+00 : f32
      %183 = vector.broadcast %cst_43 : f32 to vector<8x8xf32>
      %184 = arith.subf %183, %182 : vector<8x8xf32>
      %185 = arith.mulf %184, %60 : vector<8x8xf32>
      %cst_44 = arith.constant 5.000000e-01 : f32
      %186 = vector.broadcast %cst_44 : f32 to vector<8x8xf32>
      %187 = arith.mulf %182, %186 : vector<8x8xf32>
      %188 = arith.addf %60, %173 : vector<8x8xf32>
      %189 = arith.mulf %187, %188 : vector<8x8xf32>
      %190 = arith.addf %185, %189 : vector<8x8xf32>
      %c0_45 = arith.constant 0 : index
      %c0_46 = arith.constant 0 : index
      %191 = vector.load %arg6[%c0_45, %c0_46] : memref<8x8xf32, #tpu.memory_space<vmem>>, vector<8x8xf32>
      tpu.vector_store %arg6[%c0_45, %c0_46], %190 {strides = array<i32>} : memref<8x8xf32, #tpu.memory_space<vmem>>, vector<8x8xf32>,
    } else {
    }
    %70 = vector.extract_strided_slice %10 {offsets = [0, 6], sizes = [8, 1], strides = [1, 1]} : vector<8x16xf32> to vector<8x1xf32>
    %71 = vector.extract_strided_slice %12 {offsets = [6, 0], sizes = [1, 8], strides = [1, 1]} : vector<16x8xf32> to vector<1x8xf32>
    %72 = vector.broadcast %70 : vector<8x1xf32> to vector<8x8xf32>
    %73 = vector.broadcast %71 : vector<1x8xf32> to vector<8x8xf32>
    %74 = arith.mulf %72, %73 : vector<8x8xf32>
    %75 = vector.extract_strided_slice %10 {offsets = [0, 7], sizes = [8, 1], strides = [1, 1]} : vector<8x16xf32> to vector<8x1xf32>
    %76 = vector.extract_strided_slice %12 {offsets = [7, 0], sizes = [1, 8], strides = [1, 1]} : vector<16x8xf32> to vector<1x8xf32>
    %77 = vector.broadcast %75 : vector<8x1xf32> to vector<8x8xf32>
    %78 = vector.broadcast %76 : vector<1x8xf32> to vector<8x8xf32>
    %79 = arith.mulf %77, %78 : vector<8x8xf32>
    %80 = arith.addf %74, %79 : vector<8x8xf32>
    %81 = vector.extract_strided_slice %10 {offsets = [0, 8], sizes = [8, 1], strides = [1, 1]} : vector<8x16xf32> to vector<8x1xf32>
    %82 = vector.extract_strided_slice %12 {offsets = [8, 0], sizes = [1, 8], strides = [1, 1]} : vector<16x8xf32> to vector<1x8xf32>
    %83 = vector.broadcast %81 : vector<8x1xf32> to vector<8x8xf32>
    %84 = vector.broadcast %82 : vector<1x8xf32> to vector<8x8xf32>
    %85 = arith.mulf %83, %84 : vector<8x8xf32>
    %86 = arith.addf %80, %85 : vector<8x8xf32>
    %87 = vector.extract_strided_slice %10 {offsets = [0, 12], sizes = [8, 1], strides = [1, 1]} : vector<8x16xf32> to vector<8x1xf32>
    %88 = vector.extract_strided_slice %12 {offsets = [12, 0], sizes = [1, 8], strides = [1, 1]} : vector<16x8xf32> to vector<1x8xf32>
    %89 = vector.broadcast %87 : vector<8x1xf32> to vector<8x8xf32>
    %90 = vector.broadcast %88 : vector<1x8xf32> to vector<8x8xf32>
    %91 = arith.addf %89, %90 : vector<8x8xf32>
    %cst_18 = arith.constant 2.000000e+00 : f32
    %92 = vector.broadcast %cst_18 : f32 to vector<8x8xf32>
    %93 = arith.mulf %92, %86 : vector<8x8xf32>
    %94 = arith.subf %91, %93 : vector<8x8xf32>
    %cst_19 = arith.constant 0.000000e+00 : f32
    %95 = vector.broadcast %cst_19 : f32 to vector<8x8xf32>
    %96 = arith.maximumf %94, %95 : vector<8x8xf32>
    %97 = math.sqrt %96 : vector<8x8xf32>
    %c0_20 = arith.constant 0 : index
    %c0_21 = arith.constant 0 : index
    %98 = vector.load %arg6[%c0_20, %c0_21] : memref<8x8xf32, #tpu.memory_space<vmem>>, vector<8x8xf32>
    %cst_22 = arith.constant 8.000000e-01 : f32
    %99 = vector.broadcast %cst_22 : f32 to vector<8x8xf32>
    %100 = arith.mulf %99, %98 : vector<8x8xf32>
    %cst_23 = arith.constant 2.000000e-01 : f32
    %101 = vector.broadcast %cst_23 : f32 to vector<8x8xf32>
    %102 = arith.mulf %101, %97 : vector<8x8xf32>
    %103 = arith.addf %100, %102 : vector<8x8xf32>
    %cst_24 = arith.constant -1.000000e+30 : f32
    %104 = vector.broadcast %cst_24 : f32 to vector<8x8xf32>
    %105 = arith.select %21, %35, %104 : vector<8x8xi1>, vector<8x8xf32>
    %cst_25 = arith.constant dense<0xFF800000> : vector<8xf32>
    %106 = vector.multi_reduction <maximumf>, %105, %cst_25 [1] : vector<8x8xf32> to vector<8xf32>
    %107 = vector.shape_cast %106 : vector<8xf32> to vector<8x1xf32>
    %108 = vector.broadcast %107 : vector<8x1xf32> to vector<8x8xf32>
    %109 = arith.subf %35, %108 : vector<8x8xf32>
    %cst_26 = arith.constant 0.000000e+00 : f32
    %110 = vector.broadcast %cst_26 : f32 to vector<8x8xf32>
    %111 = arith.minimumf %109, %110 : vector<8x8xf32>
    %112 = math.exp %111 : vector<8x8xf32>
    %cst_27 = arith.constant 0.000000e+00 : f32
    %113 = vector.broadcast %cst_27 : f32 to vector<8x8xf32>
    %114 = arith.select %21, %112, %113 : vector<8x8xi1>, vector<8x8xf32>
    %cst_28 = arith.constant 0.000000e+00 : f32
    %115 = vector.broadcast %cst_28 : f32 to vector<8x8xf32>
    %116 = arith.select %21, %111, %115 : vector<8x8xi1>, vector<8x8xf32>
    %117 = vector.shape_cast %116 : vector<8x8xf32> to vector<1x8x8xf32>
    %cst_29 = arith.constant dense<0.000000e+00> : vector<1xf32>
    %118 = vector.multi_reduction <add>, %117, %cst_29 [1, 2] : vector<1x8x8xf32> to vector<1xf32>
    %119 = vector.shape_cast %118 : vector<1xf32> to vector<1x1x1xf32>
    %120 = vector.extract %119[0, 0, 0] : f32 from vector<1x1x1xf32>
    %121 = vector.shape_cast %103 : vector<8x8xf32> to vector<8x1x8xf32>
    %122 = vector.shape_cast %103 : vector<8x8xf32> to vector<8x8x1xf32>
    %123 = vector.broadcast %121 : vector<8x1x8xf32> to vector<8x8x8xf32>
    %124 = vector.broadcast %122 : vector<8x8x1xf32> to vector<8x8x8xf32>
    %125 = arith.cmpf oge, %123, %124 : vector<8x8x8xf32>
    %126 = vector.shape_cast %114 : vector<8x8xf32> to vector<8x1x8xf32>
    %cst_30 = arith.constant 0.000000e+00 : f32
    %127 = vector.shape_cast %126 : vector<8x1x8xf32> to vector<8x1x8xf32>
    %128 = vector.broadcast %127 : vector<8x1x8xf32> to vector<8x8x8xf32>
    %129 = vector.broadcast %cst_30 : f32 to vector<8x8x8xf32>
    %130 = arith.select %125, %128, %129 : vector<8x8x8xi1>, vector<8x8x8xf32>
    %cst_31 = arith.constant dense<0.000000e+00> : vector<8x8xf32>
    %131 = vector.multi_reduction <add>, %130, %cst_31 [2] : vector<8x8x8xf32> to vector<8x8xf32>
    %cst_32 = arith.constant 1.000000e-30 : f32
    %132 = vector.broadcast %cst_32 : f32 to vector<8x8xf32>
    %133 = arith.addf %131, %132 : vector<8x8xf32>
    %134 = math.log %133 : vector<8x8xf32>
    %cst_33 = arith.constant 0.000000e+00 : f32
    %135 = vector.broadcast %cst_33 : f32 to vector<8x8xf32>
    %136 = arith.select %21, %134, %135 : vector<8x8xi1>, vector<8x8xf32>
    %137 = vector.shape_cast %136 : vector<8x8xf32> to vector<1x8x8xf32>
    %cst_34 = arith.constant dense<0.000000e+00> : vector<1xf32>
    %138 = vector.multi_reduction <add>, %137, %cst_34 [1, 2] : vector<1x8x8xf32> to vector<1xf32>
    %139 = vector.shape_cast %138 : vector<1xf32> to vector<1x1x1xf32>
    %140 = vector.extract %139[0, 0, 0] : f32 from vector<1x1x1xf32>
    %141 = arith.subf %140, %120 : f32
    %c1_i32_35 = arith.constant 1 : i32
    %142 = arith.subi %2, %c1_i32_35 : i32
    %143 = arith.muli %2, %142 : i32
    %144 = arith.sitofp %143 : i32 to f32
    %cst_36 = arith.constant 1.000000e+00 : f32
    %145 = arith.maximumf %144, %cst_36 : f32
    %146 = arith.divf %141, %145 : f32
    %147 = vector.broadcast %146 : f32 to vector<1x8x128xf32>
    %c0_37 = arith.constant 0 : index
    %c0_38 = arith.constant 0 : index
    %c0_39 = arith.constant 0 : index
    %148 = vector.load %arg5[%c0_37, %c0_38, %c0_39] : memref<1x8x128xf32, #tpu.memory_space<vmem>>, vector<1x8x128xf32>
    tpu.vector_store %arg5[%c0_37, %c0_38, %c0_39], %147 {strides = array<i32>} : memref<1x8x128xf32, #tpu.memory_space<vmem>>, vector<1x8x128xf32>,
    return
  }
  func.func @transform_0(%arg0: i32, %arg1: memref<6xi32, #tpu.memory_space<smem>>) -> (i32, i32, i32) {
    %c0_i32 = arith.constant 0 : i32
    %c0_i32_0 = arith.constant 0 : i32
    %c0_i32_1 = arith.constant 0 : i32
    return %arg0, %c0_i32, %c0_i32_0 : i32, i32, i32
  }
  func.func @transform_1(%arg0: i32, %arg1: memref<6xi32, #tpu.memory_space<smem>>) -> (i32, i32, i32) {
    %c0_i32 = arith.constant 0 : i32
    %c0_i32_0 = arith.constant 0 : i32
    %c0_i32_1 = arith.constant 0 : i32
    return %arg0, %c0_i32, %c0_i32_0 : i32, i32, i32
  }
  func.func @transform_2(%arg0: i32, %arg1: memref<6xi32, #tpu.memory_space<smem>>) -> (i32, i32, i32) {
    %c0_i32 = arith.constant 0 : i32
    %c0_i32_0 = arith.constant 0 : i32
    %c0_i32_1 = arith.constant 0 : i32
    return %arg0, %c0_i32, %c0_i32_0 : i32, i32, i32
  }
  func.func @transform_3(%arg0: i32, %arg1: memref<6xi32, #tpu.memory_space<smem>>) -> (i32, i32, i32) {
    %c0_i32 = arith.constant 0 : i32
    %c0_i32_0 = arith.constant 0 : i32
    %c0_i32_1 = arith.constant 0 : i32
    return %arg0, %c0_i32, %c0_i32_0 : i32, i32, i32
  }
}

</mosaic_0001>

<llo_original>
// kernel: tpu_custom_call.1
$region0: #{tpu_custom_call.1}
  #allocation0 [shape = 'u32[]', space=smem, size = 0x4, offset = 0x4, fixed_abs, tag = 'smem constant byte address 0x4 - core index']
  #allocation1 [shape = 'u32[144,128]{1,0:T(1,128)}', space=vmem, size = 0x12000, scoped, tag = 'internal scratch']
  #allocation2 [shape = 'f32[8,8]{1,0:T(8,128)}', space=vmem, size = 0x1000, scoped, tag = 'scratch operand']
  #allocation3 [shape = 's32[1]{0}', space=sflag, size = 0x4, scoped, tag = 'scoped memory for tpu_custom_call.1']
  #allocation4 [shape = 'u8[512]{0}', space=smem, size = 0x200, scoped, tag = 'prefetched SMEM operand 0']
  %s0 = inlined_call_operand.vmem [shape: s32[6], index: 0, kind: input, shape index: {}]
  %s1 = inlined_call_operand.vmem [shape: f32[3,8,128], index: 1, kind: input, shape index: {}]
  %s2 = inlined_call_operand.vmem [shape: f32[3,8,16], index: 2, kind: input, shape index: {}]
  %s3 = inlined_call_operand.vmem [shape: f32[3,16,8], index: 3, kind: input, shape index: {}]
  %s4 = inlined_call_operand.hbm [shape: f32[3,8,128], index: 4, kind: output, shape index: {}]
  %s5 = sld [smem:[#allocation0]]
  $region57: #{tpu_custom_call.1} parent=0
    _
  %s7 = ssub.s32 1, %s5
  %s8 = scalar_select 0, %s7, %s5
  %s9 = sshll.u32 %s0, 4
  %s10 = int_to_ptr.vmem [resolvable:$true] %s9
  %12 = dma.vmem_to_smem %s10, 16, [#allocation4], [#allocation3]
  %13 = dma.done [#allocation3], 16
  %14 = sfence
  $region1: #{tpu_custom_call.1} parent=0
    #allocation5 [shape = 'u8[8192]{0}', space=vmem, size = 0x2000, scoped, tag = 'output window, operand 0']
    #allocation6 [shape = 's32[2]{0}', space=sflag, size = 0x8, scoped, tag = 'scoped memory for tpu_custom_call.1']
    %15 = vsyncpa [#allocation6], 0
    %s16 = scalar_lea.sflag [#allocation6], 1
    %17 = vsyncpa %s16, 0
    loop: start=0, step=1, limit=5
    $region2: #{tpu_custom_call.1} parent=1 // loop_pre_header
      _
    $region3: #{tpu_custom_call.1} parent=1 // loop_header
      %s19 = sphi 0, %s23
      %p20 = scmp.ge.s32.totalorder %s19, 5
      %s29 = sphi 0, %s31
      %s32 = sphi 0, %s29
      %s33 = sphi 0, %s32
      %s49 = sphi 0, %s33
      %s55 = sphi 0, %s57
      %s58 = sphi 0, %s55
      %s59 = sphi 0, %s58
      %s75 = sphi 0, %s59
      %s81 = sphi 0, %s83
      %s84 = sphi 0, %s81
      %s85 = sphi 0, %s84
      %s101 = sphi 0, %s85
      %s107 = sphi 0, %s109
      %s110 = sphi 0, %s107
      %s111 = sphi 0, %s110
      %s127 = sphi 0, %s111
    $region4: #{tpu_custom_call.1} parent=1 // loop_header_branch
      %22 = sbr.rel (%p20) target = $region8
    $region5: #{tpu_custom_call.1} parent=1 // loop_body
      %s24 = ssub.s32 %s19, 1
      %s25 = ssub.s32 %s19, 2
      %s26 = sadd.s32 %s19, 1
      %s27 = ssub.s32 %s19, %s26
      %p28 = scmp.eq.s32.totalorder %s27, 0
      %s30 = sadd.s32 %s29, 1
      %s31 = scalar_select %p28, %s29, %s30
      %p34 = pneg %p28
      %p35 = scmp.eq.s32.totalorder %s19, 2
      %p36 = por %p34, %p35
      %p37 = scmp.ne.s32.totalorder %s29, %s32
      %p38 = scmp.eq.s32.totalorder %s19, 0
      %p39 = por %p37, %p38
      %p40 = scmp.ne.s32.totalorder %s29, %s32
      %p41 = scmp.eq.s32.totalorder %s24, 2
      %p42 = por %p40, %p41
      %p43 = scmp.ne.s32.totalorder %s32, %s33
      %p44 = scmp.eq.s32.totalorder %s24, 0
      %p45 = por %p43, %p44
      %p46 = scmp.ne.s32.totalorder %s32, %s33
      %p47 = scmp.eq.s32.totalorder %s25, 2
      %p48 = por %p46, %p47
      %p50 = scmp.ne.s32.totalorder %s33, %s49
      %p51 = scmp.eq.s32.totalorder %s25, 0
      %p52 = por %p50, %p51
      %s53 = ssub.s32 %s19, %s26
      %p54 = scmp.eq.s32.totalorder %s53, 0
      %s56 = sadd.s32 %s55, 1
      %s57 = scalar_select %p54, %s55, %s56
      %p60 = pneg %p54
      %p61 = scmp.eq.s32.totalorder %s19, 2
      %p62 = por %p60, %p61
      %p63 = scmp.ne.s32.totalorder %s55, %s58
      %p64 = scmp.eq.s32.totalorder %s19, 0
      %p65 = por %p63, %p64
      %p66 = scmp.ne.s32.totalorder %s55, %s58
      %p67 = scmp.eq.s32.totalorder %s24, 2
      %p68 = por %p66, %p67
      %p69 = scmp.ne.s32.totalorder %s58, %s59
      %p70 = scmp.eq.s32.totalorder %s24, 0
      %p71 = por %p69, %p70
      %p72 = scmp.ne.s32.totalorder %s58, %s59
      %p73 = scmp.eq.s32.totalorder %s25, 2
      %p74 = por %p72, %p73
      %p76 = scmp.ne.s32.totalorder %s59, %s75
      %p77 = scmp.eq.s32.totalorder %s25, 0
      %p78 = por %p76, %p77
      %s79 = ssub.s32 %s19, %s26
      %p80 = scmp.eq.s32.totalorder %s79, 0
      %s82 = sadd.s32 %s81, 1
      %s83 = scalar_select %p80, %s81, %s82
      %p86 = pneg %p80
      %p87 = scmp.eq.s32.totalorder %s19, 2
      %p88 = por %p86, %p87
      %p89 = scmp.ne.s32.totalorder %s81, %s84
      %p90 = scmp.eq.s32.totalorder %s19, 0
      %p91 = por %p89, %p90
      %p92 = scmp.ne.s32.totalorder %s81, %s84
      %p93 = scmp.eq.s32.totalorder %s24, 2
      %p94 = por %p92, %p93
      %p95 = scmp.ne.s32.totalorder %s84, %s85
      %p96 = scmp.eq.s32.totalorder %s24, 0
      %p97 = por %p95, %p96
      %p98 = scmp.ne.s32.totalorder %s84, %s85
      %p99 = scmp.eq.s32.totalorder %s25, 2
      %p100 = por %p98, %p99
      %p102 = scmp.ne.s32.totalorder %s85, %s101
      %p103 = scmp.eq.s32.totalorder %s25, 0
      %p104 = por %p102, %p103
      %s105 = ssub.s32 %s19, %s26
      %p106 = scmp.eq.s32.totalorder %s105, 0
      %s108 = sadd.s32 %s107, 1
      %s109 = scalar_select %p106, %s107, %s108
      %p112 = pneg %p106
      %p113 = scmp.eq.s32.totalorder %s19, 2
      %p114 = por %p112, %p113
      %p115 = scmp.ne.s32.totalorder %s107, %s110
      %p116 = scmp.eq.s32.totalorder %s19, 0
      %p117 = por %p115, %p116
      %p118 = scmp.ne.s32.totalorder %s107, %s110
      %p119 = scmp.eq.s32.totalorder %s24, 2
      %p120 = por %p118, %p119
      %p121 = scmp.ne.s32.totalorder %s110, %s111
      %p122 = scmp.eq.s32.totalorder %s24, 0
      %p123 = por %p121, %p122
      %p124 = scmp.ne.s32.totalorder %s110, %s111
      %p125 = scmp.eq.s32.totalorder %s25, 2
      %p126 = por %p124, %p125
      %p128 = scmp.ne.s32.totalorder %s111, %s127
      %p129 = scmp.eq.s32.totalorder %s25, 0
      %p130 = por %p128, %p129
      %p131 = scmp.le.s32.totalorder 1, %s19
      %p132 = scmp.lt.s32.totalorder %s19, 4
      %p133 = pnand %p131, %p132
      %p134 = pneg %p133
      // Predicated region
      $region9: #{tpu_custom_call.1} parent=5 // pred_check
        _
      $region10: #{tpu_custom_call.1} parent=5 // pred_check_branch
        %136 = sbr.rel (%p133) target = $region12
      $region11: #{tpu_custom_call.1} parent=5 // pred_region
        %s137 = ssub.s32 %s19, 1
      $region12: #{tpu_custom_call.1} parent=5 // pred_fallthru
        _
      %p138 = scmp.lt.s32.totalorder %s19, 3
      // Predicated region
      $region13: #{tpu_custom_call.1} parent=5 // pred_check
        %p139 = pneg %p138
      $region14: #{tpu_custom_call.1} parent=5 // pred_check_branch
        %141 = sbr.rel (%p139) target = $region16
      $region15: #{tpu_custom_call.1} parent=5 // pred_region
        // Predicated region
        $region17: #{tpu_custom_call.1} parent=15 // pred_check
          %p142 = pneg %p39
        $region18: #{tpu_custom_call.1} parent=15 // pred_check_branch
          %144 = sbr.rel (%p142) target = $region20
        $region19: #{tpu_custom_call.1} parent=15 // pred_region
          %p145 = scmp.lt.s32.totalorder %s19, 2
          %s146 = scalar_select %p145, %s19, 2
          %s147 = smul.addr %s146, 8
          %s148 = scalar_lea.vmem %s1, %s147
        $region20: #{tpu_custom_call.1} parent=15 // pred_fallthru
          _
        // Predicated region
        $region21: #{tpu_custom_call.1} parent=15 // pred_check
          %p149 = pneg %p65
        $region22: #{tpu_custom_call.1} parent=15 // pred_check_branch
          %151 = sbr.rel (%p149) target = $region24
        $region23: #{tpu_custom_call.1} parent=15 // pred_region
          %p152 = scmp.lt.s32.totalorder %s19, 2
          %s153 = scalar_select %p152, %s19, 2
          %s154 = smul.addr %s153, 8
          %s155 = scalar_lea.vmem %s2, %s154
        $region24: #{tpu_custom_call.1} parent=15 // pred_fallthru
          _
        // Predicated region
        $region25: #{tpu_custom_call.1} parent=15 // pred_check
          %p156 = pneg %p91
        $region26: #{tpu_custom_call.1} parent=15 // pred_check_branch
          %158 = sbr.rel (%p156) target = $region28
        $region27: #{tpu_custom_call.1} parent=15 // pred_region
          %p159 = scmp.lt.s32.totalorder %s19, 2
          %s160 = scalar_select %p159, %s19, 2
          %s161 = smul.addr %s160, 2
          %s162 = smul.addr %s161, 8
          %s163 = scalar_lea.vmem %s3, %s162
        $region28: #{tpu_custom_call.1} parent=15 // pred_fallthru
          _
      $region16: #{tpu_custom_call.1} parent=5 // pred_fallthru
        _
      %p164 = scmp.le.s32.totalorder 1, %s19
      %p165 = scmp.lt.s32.totalorder %s19, 4
      %p166 = pnand %p164, %p165
      %p167 = pneg %p166
      // Predicated region
      $region29: #{tpu_custom_call.1} parent=5 // pred_check
        _
      $region30: #{tpu_custom_call.1} parent=5 // pred_check_branch
        %169 = sbr.rel (%p166) target = $region32
      $region31: #{tpu_custom_call.1} parent=5 // pred_region
        %s170 = ssub.s32 %s19, 1
        %p171 = scmp.lt.s32.totalorder %s24, 2
        %s172 = scalar_select %p171, %s24, 2
        %s173 = smul.addr %s172, 8
        %s174 = scalar_lea.vmem %s1, %s173
        %p175 = pneg %p45
        %p176 = pneg %p42
        %p177 = scmp.lt.s32.totalorder %s24, 2
        %s178 = scalar_select %p177, %s24, 2
        %s179 = smul.addr %s178, 8
        %s180 = scalar_lea.vmem %s2, %s179
        %p181 = pneg %p71
        %p182 = pneg %p68
        %p183 = scmp.lt.s32.totalorder %s24, 2
        %s184 = scalar_select %p183, %s24, 2
        %s185 = smul.addr %s184, 2
        %s186 = smul.addr %s185, 8
        %s187 = scalar_lea.vmem %s3, %s186
        %p188 = pneg %p97
        %p189 = pneg %p94
        %p190 = pneg %p123
        %p191 = pneg %p120
        %s192 = sand.u32 %s110, 1
        %s193 = scalar_lea.sflag [#allocation6], %s192
        %s194 = sand.u32 %s110, 1
        %s195 = smul.addr %s194, 8
        %s196 = scalar_lea.vmem [#allocation5], %s195
        %p197 = scmp.lt.s32.totalorder %s24, 2
        %s198 = scalar_select %p197, %s24, 2
        %s199 = smul.addr %s198, 8
        %s200 = scalar_lea.vmem %s1, %s199
        %p201 = scmp.lt.s32.totalorder %s24, 2
        %s202 = scalar_select %p201, %s24, 2
        %s203 = smul.addr %s202, 8
        %s204 = scalar_lea.vmem %s2, %s203
        %p205 = scmp.lt.s32.totalorder %s24, 2
        %s206 = scalar_select %p205, %s24, 2
        %s207 = smul.addr %s206, 2
        %s208 = smul.addr %s207, 8
        %s209 = scalar_lea.vmem %s3, %s208
        %s210 = smul.u32 %s24, 2
        %s211 = sld [smem:[#allocation4 + %s210]]
        %s212 = sadd.s32 %s210, 1
        %s213 = sld [smem:[#allocation4 + %s212]]
        %v214 = vld [vmem:[%s200] sm:$0xff]
        %v215 = vld [vmem:[%s204] sm:$0xff]
        %v216 = vld [vmem:[%s209] sm:$0xff]
        %v217 = vld [vmem:[%s209 + $0x8] sm:$0xff]
        %v218 = vlaneseq
        %v219 = vshrl.u32 %v218, 7
        %v220 = vlaneseq
        %v221 = vand.u32 %v220, 127
        %v222 = vstv %s211
        %vm223 = vcmp.lt.s32.totalorder %v219, %v222
        %vm224 = vcmp.lt.s32.totalorder %v221, %v222
        %vm225 = vmand %vm223, %vm224
        %vm226 = vcmp.ne.s32.totalorder %v219, %v221
        %vm227 = vmand %vm225, %vm226
        %228 = vmatprep.subr.mxu0 0.0
        %229 = vmatpush1.xpose.msra.mxu0 %v214
        %230 = vmatprep.subr.mxu0 0.0
        %231 = vmatpush1.xpose.msra.mxu0 0.0
        %232 = vmatprep.subr.mxu0 0.0
        %233 = vmatpush1.xpose.msra.mxu0 0.0
        %234 = vmatprep.subr.mxu0 0.0
        %235 = vmatpush1.xpose.msra.mxu0 0.0
        %236 = vmatprep.subr.mxu0 0.0
        %237 = vmatpush1.xpose.msra.mxu0 0.0
        %238 = vmatprep.subr.mxu0 0.0
        %239 = vmatpush1.xpose.msra.mxu0 0.0
        %240 = vmatprep.subr.mxu0 0.0
        %241 = vmatpush1.xpose.msra.mxu0 0.0
        %242 = vmatprep.subr.mxu0 0.0
        %243 = vmatpush1.xpose.msra.mxu0 0.0
        %244 = vmatprep.subr.mxu0 0.0
        %245 = vmatpush1.xpose.msra.mxu0 0.0
        %246 = vmatprep.subr.mxu0 0.0
        %247 = vmatpush1.xpose.msra.mxu0 0.0
        %248 = vmatprep.subr.mxu0 0.0
        %249 = vmatpush1.xpose.msra.mxu0 0.0
        %250 = vmatprep.subr.mxu0 0.0
        %251 = vmatpush1.xpose.msra.mxu0 0.0
        %252 = vmatprep.subr.mxu0 0.0
        %253 = vmatpush1.xpose.msra.mxu0 0.0
        %254 = vmatprep.subr.mxu0 0.0
        %255 = vmatpush1.xpose.msra.mxu0 0.0
        %256 = vmatprep.subr.mxu0 0.0
        %257 = vmatpush1.xpose.msra.mxu0 0.0
        %258 = vmatprep.subr.mxu0 0.0
        %259 = vmatpush1.xpose.msra.mxu0 0.0
        %260 = vmatprep.subr.mxu0 0.0
        %261 = vmatpush1.xpose.msra.mxu0 0.0
        %262 = vmatprep.subr.mxu0 0.0
        %263 = vmatpush1.xpose.msra.mxu0 0.0
        %264 = vmatprep.subr.mxu0 0.0
        %265 = vmatpush1.xpose.msra.mxu0 0.0
        %266 = vmatprep.subr.mxu0 0.0
        %267 = vmatpush1.xpose.msra.mxu0 0.0
        %268 = vmatprep.subr.mxu0 0.0
        %269 = vmatpush1.xpose.msra.mxu0 0.0
        %270 = vmatprep.subr.mxu0 0.0
        %271 = vmatpush1.xpose.msra.mxu0 0.0
        %272 = vmatprep.subr.mxu0 0.0
        %273 = vmatpush1.xpose.msra.mxu0 0.0
        %274 = vmatprep.subr.mxu0 0.0
        %275 = vmatpush1.xpose.msra.mxu0 0.0
        %276 = vmatprep.subr.mxu0 0.0
        %277 = vmatpush1.xpose.msra.mxu0 0.0
        %278 = vmatprep.subr.mxu0 0.0
        %279 = vmatpush1.xpose.msra.mxu0 0.0
        %280 = vmatprep.subr.mxu0 0.0
        %281 = vmatpush1.xpose.msra.mxu0 0.0
        %282 = vmatprep.subr.mxu0 0.0
        %283 = vmatpush1.xpose.msra.mxu0 0.0
        %284 = vmatprep.subr.mxu0 0.0
        %285 = vmatpush1.xpose.msra.mxu0 0.0
        %286 = vmatprep.subr.mxu0 0.0
        %287 = vmatpush1.xpose.msra.mxu0 0.0
        %288 = vmatprep.subr.mxu0 0.0
        %289 = vmatpush1.xpose.msra.mxu0 0.0
        %290 = vmatprep.subr.mxu0 0.0
        %291 = vmatpush1.xpose.msra.mxu0 0.0
        %292 = vmatprep.mubr.f32.mxu0 0.0
        %293 = vmatmul.mubr.f32.gmra.mrb[0].mxu0 %v214
        %v294 = vpop.f32.mrb[0].mxu0
        %v295 = vadd.f32 0.0, %v294
        %v296 = vpop.f32.mrb[0].mxu0
        %297 = vdwg.mxu0
        %299 = vset.pattern.permute.xlu0 13
        %300 = vperm.xlu0 %299, %v215
        %v301 = vpop.permute.xlu0 %300
        %v303 = vlaneseq
        %v304 = vshrl.u32 %v303, 7
        %v305 = vsub.s32 5, %v304
        %v306 = vrot.slane %v217, %v305
        %v307 = vadd.f32 %v301, %v306
        %v308 = vmul.f32 %v295, 2.0
        %v309 = vsub.f32 %v307, %v308
        %v310 = vmax.f32 %v309, 0.0
        %v311 = vrsqrt.pop %v310
        %v312 = vmul.f32 %v310, %v311
        %vm313 = vcmp.eq.f32.partialorder %v310, inf
        %v314 = vsel %vm313, %v310, %v312
        %vm315 = vcmp.eq.f32.partialorder %v310, 0.0
        %v316 = vand.u32 %v310, 2147483648
        %v317 = vsel %vm315, %v316, %v314
        %v318 = vmul.f32 %v317, -0.5
        %319 = vset.pattern.permute.xlu0 10
        %320 = vperm.xlu0 %319, %v215
        %v321 = vpop.permute.xlu0 %320
        %v323 = vlaneseq
        %v324 = vshrl.u32 %v323, 7
        %v325 = vsub.s32 2, %v324
        %v326 = vrot.slane %v217, %v325
        %v327 = vmul.f32 %v321, %v326
        %328 = vset.pattern.permute.xlu0 0
        %329 = vperm.xlu0 %328, %v215
        %v330 = vpop.permute.xlu0 %329
        %v332 = vlaneseq
        %v333 = vshrl.u32 %v332, 7
        %v334 = vsub.s32 0, %v333
        %v335 = vrot.slane %v216, %v334
        %v336 = vmul.f32 %v330, %v335
        %337 = vset.pattern.permute.xlu0 1
        %338 = vperm.xlu0 %337, %v215
        %v339 = vpop.permute.xlu0 %338
        %v341 = vlaneseq
        %v342 = vshrl.u32 %v341, 7
        %v343 = vsub.s32 1, %v342
        %v344 = vrot.slane %v216, %v343
        %v345 = vmul.f32 %v339, %v344
        %v346 = vadd.f32 %v336, %v345
        %347 = vset.pattern.permute.xlu0 2
        %348 = vperm.xlu0 %347, %v215
        %v349 = vpop.permute.xlu0 %348
        %v351 = vlaneseq
        %v352 = vshrl.u32 %v351, 7
        %v353 = vsub.s32 2, %v352
        %v354 = vrot.slane %v216, %v353
        %v355 = vmul.f32 %v349, %v354
        %v356 = vadd.f32 %v346, %v355
        %v357 = vmul.f32 %v356, %v327
        %v358 = vsub.f32 1.0, %v357
        %p359 = scmp.eq.s32.totalorder %s213, 0
        // Predicated region
        $region33: #{tpu_custom_call.1} parent=31 // pred_check
          %p360 = pneg %p359
        $region34: #{tpu_custom_call.1} parent=31 // pred_check_branch
          %362 = sbr.rel (%p360) target = $region36
        $region35: #{tpu_custom_call.1} parent=31 // pred_region
          %vm363 = vcmask 64512
          %364 = vst.msk [vmem:[#allocation2] sm:$0xff] %vm363, %v358
        $region36: #{tpu_custom_call.1} parent=31 // pred_fallthru
          _
        %p365 = scmp.eq.s32.totalorder %s213, 1
        // Predicated region
        $region37: #{tpu_custom_call.1} parent=31 // pred_check
          %p366 = pneg %p365
        $region38: #{tpu_custom_call.1} parent=31 // pred_check_branch
          %368 = sbr.rel (%p366) target = $region40
        $region39: #{tpu_custom_call.1} parent=31 // pred_region
          %369 = vset.pattern.permute.xlu0 11
          %370 = vperm.xlu0 %369, %v215
          %v371 = vpop.permute.xlu0 %370
          %v373 = vlaneseq
          %v374 = vshrl.u32 %v373, 7
          %v375 = vsub.s32 3, %v374
          %v376 = vrot.slane %v217, %v375
          %v377 = vmul.f32 %v371, %v376
          %378 = vset.pattern.permute.xlu0 3
          %379 = vperm.xlu0 %378, %v215
          %v380 = vpop.permute.xlu0 %379
          %v382 = vlaneseq
          %v383 = vshrl.u32 %v382, 7
          %v384 = vsub.s32 3, %v383
          %v385 = vrot.slane %v216, %v384
          %v386 = vmul.f32 %v380, %v385
          %387 = vset.pattern.permute.xlu0 4
          %388 = vperm.xlu0 %387, %v215
          %v389 = vpop.permute.xlu0 %388
          %v391 = vlaneseq
          %v392 = vshrl.u32 %v391, 7
          %v393 = vsub.s32 4, %v392
          %v394 = vrot.slane %v216, %v393
          %v395 = vmul.f32 %v389, %v394
          %v396 = vadd.f32 %v386, %v395
          %397 = vset.pattern.permute.xlu0 5
          %398 = vperm.xlu0 %397, %v215
          %v399 = vpop.permute.xlu0 %398
          %v401 = vlaneseq
          %v402 = vshrl.u32 %v401, 7
          %v403 = vsub.s32 5, %v402
          %v404 = vrot.slane %v216, %v403
          %v405 = vmul.f32 %v399, %v404
          %v406 = vadd.f32 %v396, %v405
          %v407 = vmul.f32 %v406, %v377
          %v408 = vsub.f32 1.0, %v407
          %v409 = vadd.f32 %v358, %v408
          %v410 = vmul.f32 %v409, 0.5
          %vm411 = vcmask 64512
          %412 = vst.msk [vmem:[#allocation2] sm:$0xff] %vm411, %v410
        $region40: #{tpu_custom_call.1} parent=31 // pred_fallthru
          _
        %p413 = scmp.eq.s32.totalorder %s213, 2
        // Predicated region
        $region41: #{tpu_custom_call.1} parent=31 // pred_check
          %p414 = pneg %p413
        $region42: #{tpu_custom_call.1} parent=31 // pred_check_branch
          %416 = sbr.rel (%p414) target = $region44
        $region43: #{tpu_custom_call.1} parent=31 // pred_region
          %417 = vset.pattern.permute.xlu0 11
          %418 = vperm.xlu0 %417, %v215
          %v419 = vpop.permute.xlu0 %418
          %v421 = vlaneseq
          %v422 = vshrl.u32 %v421, 7
          %v423 = vsub.s32 3, %v422
          %v424 = vrot.slane %v217, %v423
          %v425 = vmul.f32 %v419, %v424
          %426 = vset.pattern.permute.xlu0 3
          %427 = vperm.xlu0 %426, %v215
          %v428 = vpop.permute.xlu0 %427
          %v430 = vlaneseq
          %v431 = vshrl.u32 %v430, 7
          %v432 = vsub.s32 3, %v431
          %v433 = vrot.slane %v216, %v432
          %v434 = vmul.f32 %v428, %v433
          %435 = vset.pattern.permute.xlu0 4
          %436 = vperm.xlu0 %435, %v215
          %v437 = vpop.permute.xlu0 %436
          %v439 = vlaneseq
          %v440 = vshrl.u32 %v439, 7
          %v441 = vsub.s32 4, %v440
          %v442 = vrot.slane %v216, %v441
          %v443 = vmul.f32 %v437, %v442
          %v444 = vadd.f32 %v434, %v443
          %445 = vset.pattern.permute.xlu0 5
          %446 = vperm.xlu0 %445, %v215
          %v447 = vpop.permute.xlu0 %446
          %v449 = vlaneseq
          %v450 = vshrl.u32 %v449, 7
          %v451 = vsub.s32 5, %v450
          %v452 = vrot.slane %v216, %v451
          %v453 = vmul.f32 %v447, %v452
          %v454 = vadd.f32 %v444, %v453
          %v455 = vmul.f32 %v454, %v425
          %v456 = vsub.f32 1.0, %v455
          %v457 = vsub.f32 1.0, %v215
          %v458 = vsub.f32 1.0, %v217
          %460 = vset.pattern.permute.xlu0 9
          %461 = vperm.xlu0 %460, %v457
          %v462 = vpop.permute.xlu0 %461
          %v464 = vlaneseq
          %v465 = vshrl.u32 %v464, 7
          %v466 = vsub.s32 1, %v465
          %v467 = vrot.slane %v458, %v466
          %v468 = vmul.f32 %v462, %v467
          %v469 = vsub.f32 1.0, %v468
          %v470 = vmul.f32 %v469, %v358
          %v471 = vmul.f32 %v468, 0.5
          %v472 = vadd.f32 %v358, %v456
          %v473 = vmul.f32 %v471, %v472
          %v474 = vadd.f32 %v470, %v473
          %vm475 = vcmask 64512
          %476 = vst.msk [vmem:[#allocation2] sm:$0xff] %vm475, %v474
        $region44: #{tpu_custom_call.1} parent=31 // pred_fallthru
          _
        %477 = vset.pattern.permute.xlu0 6
        %478 = vperm.xlu0 %477, %v215
        %v479 = vpop.permute.xlu0 %478
        %v481 = vlaneseq
        %v482 = vshrl.u32 %v481, 7
        %v483 = vsub.s32 6, %v482
        %v484 = vrot.slane %v216, %v483
        %v485 = vmul.f32 %v479, %v484
        %486 = vset.pattern.permute.xlu0 7
        %487 = vperm.xlu0 %486, %v215
        %v488 = vpop.permute.xlu0 %487
        %v490 = vlaneseq
        %v491 = vshrl.u32 %v490, 7
        %v492 = vsub.s32 7, %v491
        %v493 = vrot.slane %v216, %v492
        %v494 = vmul.f32 %v488, %v493
        %v495 = vadd.f32 %v485, %v494
        %496 = vset.pattern.permute.xlu0 8
        %497 = vperm.xlu0 %496, %v215
        %v498 = vpop.permute.xlu0 %497
        %v500 = vlaneseq
        %v501 = vshrl.u32 %v500, 7
        %v502 = vsub.s32 0, %v501
        %v503 = vrot.slane %v217, %v502
        %v504 = vmul.f32 %v498, %v503
        %v505 = vadd.f32 %v495, %v504
        %506 = vset.pattern.permute.xlu0 12
        %507 = vperm.xlu0 %506, %v215
        %v508 = vpop.permute.xlu0 %507
        %v510 = vlaneseq
        %v511 = vshrl.u32 %v510, 7
        %v512 = vsub.s32 4, %v511
        %v513 = vrot.slane %v217, %v512
        %v514 = vadd.f32 %v508, %v513
        %v515 = vmul.f32 %v505, 2.0
        %v516 = vsub.f32 %v514, %v515
        %v517 = vmax.f32 %v516, 0.0
        %v518 = vrsqrt.pop %v517
        %v519 = vmul.f32 %v517, %v518
        %vm520 = vcmp.eq.f32.partialorder %v517, inf
        %v521 = vsel %vm520, %v517, %v519
        %vm522 = vcmp.eq.f32.partialorder %v517, 0.0
        %v523 = vand.u32 %v517, 2147483648
        %v524 = vsel %vm522, %v523, %v521
        %v525 = vld [vmem:[#allocation2] sm:$0xff]
        %v526 = vmul.f32 %v525, 0.8
        %v527 = vmul.f32 %v524, 0.2
        %v528 = vadd.f32 %v526, %v527
        %v529 = vsel %vm227, %v318, -1e+30
        %vm530 = vcmask 64512
        %v531 = vsel %vm530, %v529, -inf
        %532 = vmax.xlane.f32.xlu0 %v531
        %v533 = vpop.xlane.xlu0 %532
        %v534 = vsub.f32 %v318, %v533
        %v535 = vmin.f32 %v534, 0.0
        %v536 = vmul.f32 %v535, 1.442695
        %v537 = vpow.pop %v536
        %v538 = vsel %vm227, %v537, 0.0
        %v539 = vsel %vm227, %v535, 0.0
        %v540 = vsel %vm530, %v539, 0.0
        %541 = vadd.xlane.f32.xlu0 %v540
        %v542 = vpop.xlane.xlu0 %541
        %v543 = vrot.slane %v542, 4
        %v544 = vadd.f32 %v542, %v543
        %v545 = vrot.slane %v544, 2
        %v546 = vadd.f32 %v544, %v545
        %v547 = vrot.slane %v546, 1
        %v548 = vadd.f32 %v546, %v547
        %s549 = vtos %v548
        %v551 = vcombine.high %v528, %v528
        %v553 = vunpack.c.l.s4 1966171168
        %v554 = vunpack.c.0.s8 %v553
        %v555 = vlaneseq
        %v556 = vshrl.u32 %v555, 7
        %v557 = vsub.s32 %v554, %v556
        %v558 = vrot.slane %v528, %v557
        %v560 = vunpack.c.l.s4 1966171168
        %v561 = vunpack.c.0.s8 %v560
        %v562 = vlaneseq
        %v563 = vshrl.u32 %v562, 7
        %v564 = vsub.s32 %v561, %v563
        %v565 = vrot.slane %v551, %v564
        %v566 = vcombine.high %v558, %v558
        %v567 = vcombine.high %v565, %v565
        %v569 = vunpack.c.l.s4 1966171168
        %v570 = vunpack.c.0.s8 %v569
        %v571 = vlaneseq
        %v572 = vshrl.u32 %v571, 7
        %v573 = vsub.s32 %v570, %v572
        %v574 = vrot.slane %v558, %v573
        %v576 = vunpack.c.l.s4 1966171168
        %v577 = vunpack.c.0.s8 %v576
        %v578 = vlaneseq
        %v579 = vshrl.u32 %v578, 7
        %v580 = vsub.s32 %v577, %v579
        %v581 = vrot.slane %v565, %v580
        %v583 = vunpack.c.l.s4 1966171168
        %v584 = vunpack.c.0.s8 %v583
        %v585 = vlaneseq
        %v586 = vshrl.u32 %v585, 7
        %v587 = vsub.s32 %v584, %v586
        %v588 = vrot.slane %v566, %v587
        %v590 = vunpack.c.l.s4 1966171168
        %v591 = vunpack.c.0.s8 %v590
        %v592 = vlaneseq
        %v593 = vshrl.u32 %v592, 7
        %v594 = vsub.s32 %v591, %v593
        %v595 = vrot.slane %v567, %v594
        %v596 = vcombine.high %v574, %v574
        %v597 = vcombine.high %v581, %v581
        %v598 = vcombine.high %v588, %v588
        %v599 = vcombine.high %v595, %v595
        %v600 = vlaneseq
        %v601 = vshrl.u32 %v600, 7
        %v602 = vsub.s32 0, %v601
        %v603 = vrot.slane %v528, %v602
        %605 = vbcast.lane.b32.xlu0 %v603, 256
        %v606 = vpop.permute.xlu0 %605
        %v607 = vlaneseq
        %v608 = vshrl.u32 %v607, 7
        %v609 = vsub.s32 1, %v608
        %v610 = vrot.slane %v528, %v609
        %612 = vbcast.lane.b32.xlu0 %v610, 256
        %v613 = vpop.permute.xlu0 %612
        %v614 = vlaneseq
        %v615 = vshrl.u32 %v614, 7
        %v616 = vsub.s32 2, %v615
        %v617 = vrot.slane %v528, %v616
        %619 = vbcast.lane.b32.xlu0 %v617, 256
        %v620 = vpop.permute.xlu0 %619
        %v621 = vlaneseq
        %v622 = vshrl.u32 %v621, 7
        %v623 = vsub.s32 3, %v622
        %v624 = vrot.slane %v528, %v623
        %626 = vbcast.lane.b32.xlu0 %v624, 256
        %v627 = vpop.permute.xlu0 %626
        %v628 = vlaneseq
        %v629 = vshrl.u32 %v628, 7
        %v630 = vsub.s32 4, %v629
        %v631 = vrot.slane %v528, %v630
        %633 = vbcast.lane.b32.xlu0 %v631, 256
        %v634 = vpop.permute.xlu0 %633
        %v635 = vlaneseq
        %v636 = vshrl.u32 %v635, 7
        %v637 = vsub.s32 5, %v636
        %v638 = vrot.slane %v528, %v637
        %640 = vbcast.lane.b32.xlu0 %v638, 256
        %v641 = vpop.permute.xlu0 %640
        %v642 = vlaneseq
        %v643 = vshrl.u32 %v642, 7
        %v644 = vsub.s32 6, %v643
        %v645 = vrot.slane %v528, %v644
        %647 = vbcast.lane.b32.xlu0 %v645, 256
        %v648 = vpop.permute.xlu0 %647
        %v649 = vlaneseq
        %v650 = vshrl.u32 %v649, 7
        %v651 = vsub.s32 7, %v650
        %v652 = vrot.slane %v528, %v651
        %654 = vbcast.lane.b32.xlu0 %v652, 256
        %v655 = vpop.permute.xlu0 %654
        %v656 = vlaneseq
        %v657 = vshrl.u32 %v656, 7
        %v658 = vsub.s32 0, %v657
        %v659 = vrot.slane %v574, %v658
        %v660 = vlaneseq
        %v661 = vshrl.u32 %v660, 7
        %v662 = vsub.s32 0, %v661
        %v663 = vrot.slane %v588, %v662
        %v664 = vlaneseq
        %v665 = vshrl.u32 %v664, 7
        %v666 = vsub.s32 0, %v665
        %v667 = vrot.slane %v596, %v666
        %v668 = vlaneseq
        %v669 = vshrl.u32 %v668, 7
        %v670 = vsub.s32 0, %v669
        %v671 = vrot.slane %v598, %v670
        %v672 = vlaneseq
        %v673 = vshrl.u32 %v672, 7
        %v674 = vsub.s32 0, %v673
        %v675 = vrot.slane %v581, %v674
        %v676 = vlaneseq
        %v677 = vshrl.u32 %v676, 7
        %v678 = vsub.s32 0, %v677
        %v679 = vrot.slane %v595, %v678
        %v680 = vlaneseq
        %v681 = vshrl.u32 %v680, 7
        %v682 = vsub.s32 0, %v681
        %v683 = vrot.slane %v597, %v682
        %v684 = vlaneseq
        %v685 = vshrl.u32 %v684, 7
        %v686 = vsub.s32 0, %v685
        %v687 = vrot.slane %v599, %v686
        %vm696 = vcmp.ge.f32.partialorder %v659, %v606
        %vm697 = vcmp.ge.f32.partialorder %v663, %v613
        %vm698 = vcmp.ge.f32.partialorder %v667, %v620
        %vm699 = vcmp.ge.f32.partialorder %v671, %v627
        %vm700 = vcmp.ge.f32.partialorder %v675, %v634
        %vm701 = vcmp.ge.f32.partialorder %v679, %v641
        %vm702 = vcmp.ge.f32.partialorder %v683, %v648
        %vm703 = vcmp.ge.f32.partialorder %v687, %v655
        %v705 = vcombine.high %v538, %v538
        %v707 = vunpack.c.l.s4 1966171168
        %v708 = vunpack.c.0.s8 %v707
        %v709 = vlaneseq
        %v710 = vshrl.u32 %v709, 7
        %v711 = vsub.s32 %v708, %v710
        %v712 = vrot.slane %v538, %v711
        %v714 = vunpack.c.l.s4 1966171168
        %v715 = vunpack.c.0.s8 %v714
        %v716 = vlaneseq
        %v717 = vshrl.u32 %v716, 7
        %v718 = vsub.s32 %v715, %v717
        %v719 = vrot.slane %v705, %v718
        %v720 = vcombine.high %v712, %v712
        %v721 = vcombine.high %v719, %v719
        %v723 = vunpack.c.l.s4 1966171168
        %v724 = vunpack.c.0.s8 %v723
        %v725 = vlaneseq
        %v726 = vshrl.u32 %v725, 7
        %v727 = vsub.s32 %v724, %v726
        %v728 = vrot.slane %v712, %v727
        %v730 = vunpack.c.l.s4 1966171168
        %v731 = vunpack.c.0.s8 %v730
        %v732 = vlaneseq
        %v733 = vshrl.u32 %v732, 7
        %v734 = vsub.s32 %v731, %v733
        %v735 = vrot.slane %v719, %v734
        %v737 = vunpack.c.l.s4 1966171168
        %v738 = vunpack.c.0.s8 %v737
        %v739 = vlaneseq
        %v740 = vshrl.u32 %v739, 7
        %v741 = vsub.s32 %v738, %v740
        %v742 = vrot.slane %v720, %v741
        %v744 = vunpack.c.l.s4 1966171168
        %v745 = vunpack.c.0.s8 %v744
        %v746 = vlaneseq
        %v747 = vshrl.u32 %v746, 7
        %v748 = vsub.s32 %v745, %v747
        %v749 = vrot.slane %v721, %v748
        %v750 = vcombine.high %v728, %v728
        %v751 = vcombine.high %v735, %v735
        %v752 = vcombine.high %v742, %v742
        %v753 = vcombine.high %v749, %v749
        %v754 = vlaneseq
        %v755 = vshrl.u32 %v754, 7
        %v756 = vsub.s32 0, %v755
        %v757 = vrot.slane %v728, %v756
        %v758 = vlaneseq
        %v759 = vshrl.u32 %v758, 7
        %v760 = vsub.s32 0, %v759
        %v761 = vrot.slane %v742, %v760
        %v762 = vlaneseq
        %v763 = vshrl.u32 %v762, 7
        %v764 = vsub.s32 0, %v763
        %v765 = vrot.slane %v750, %v764
        %v766 = vlaneseq
        %v767 = vshrl.u32 %v766, 7
        %v768 = vsub.s32 0, %v767
        %v769 = vrot.slane %v752, %v768
        %v770 = vlaneseq
        %v771 = vshrl.u32 %v770, 7
        %v772 = vsub.s32 0, %v771
        %v773 = vrot.slane %v735, %v772
        %v774 = vlaneseq
        %v775 = vshrl.u32 %v774, 7
        %v776 = vsub.s32 0, %v775
        %v777 = vrot.slane %v749, %v776
        %v778 = vlaneseq
        %v779 = vshrl.u32 %v778, 7
        %v780 = vsub.s32 0, %v779
        %v781 = vrot.slane %v751, %v780
        %v782 = vlaneseq
        %v783 = vshrl.u32 %v782, 7
        %v784 = vsub.s32 0, %v783
        %v785 = vrot.slane %v753, %v784
        %v794 = vsel %vm696, %v757, 0.0
        %v795 = vsel %vm697, %v761, 0.0
        %v796 = vsel %vm698, %v765, 0.0
        %v797 = vsel %vm699, %v769, 0.0
        %v798 = vsel %vm700, %v773, 0.0
        %v799 = vsel %vm701, %v777, 0.0
        %v800 = vsel %vm702, %v781, 0.0
        %v801 = vsel %vm703, %v785, 0.0
        %v802 = vsel %vm530, %v794, 0.0
        %803 = vadd.xlane.f32.xlu0 %v802
        %v804 = vpop.xlane.xlu0 %803
        %v805 = vsel %vm530, %v795, 0.0
        %806 = vadd.xlane.f32.xlu0 %v805
        %v807 = vpop.xlane.xlu0 %806
        %v808 = vsel %vm530, %v796, 0.0
        %809 = vadd.xlane.f32.xlu0 %v808
        %v810 = vpop.xlane.xlu0 %809
        %v811 = vsel %vm530, %v797, 0.0
        %812 = vadd.xlane.f32.xlu0 %v811
        %v813 = vpop.xlane.xlu0 %812
        %v814 = vsel %vm530, %v798, 0.0
        %815 = vadd.xlane.f32.xlu0 %v814
        %v816 = vpop.xlane.xlu0 %815
        %v817 = vsel %vm530, %v799, 0.0
        %818 = vadd.xlane.f32.xlu0 %v817
        %v819 = vpop.xlane.xlu0 %818
        %v820 = vsel %vm530, %v800, 0.0
        %821 = vadd.xlane.f32.xlu0 %v820
        %v822 = vpop.xlane.xlu0 %821
        %v823 = vsel %vm530, %v801, 0.0
        %824 = vadd.xlane.f32.xlu0 %v823
        %v825 = vpop.xlane.xlu0 %824
        %v826 = vadd.f32 %v804, 1e-30
        %v827 = vadd.f32 %v807, 1e-30
        %v828 = vadd.f32 %v810, 1e-30
        %v829 = vadd.f32 %v813, 1e-30
        %v830 = vadd.f32 %v816, 1e-30
        %v831 = vadd.f32 %v819, 1e-30
        %v832 = vadd.f32 %v822, 1e-30
        %v833 = vadd.f32 %v825, 1e-30
        %v834 = vlog2.pop %v826
        %v835 = vmul.f32 %v834, 0.6931472
        %v836 = vlog2.pop %v827
        %v837 = vmul.f32 %v836, 0.6931472
        %v838 = vlog2.pop %v828
        %v839 = vmul.f32 %v838, 0.6931472
        %v840 = vlog2.pop %v829
        %v841 = vmul.f32 %v840, 0.6931472
        %v842 = vlog2.pop %v830
        %v843 = vmul.f32 %v842, 0.6931472
        %v844 = vlog2.pop %v831
        %v845 = vmul.f32 %v844, 0.6931472
        %v846 = vlog2.pop %v832
        %v847 = vmul.f32 %v846, 0.6931472
        %v848 = vlog2.pop %v833
        %v849 = vmul.f32 %v848, 0.6931472
        %v858 = vlaneseq
        %v859 = vshrl.u32 %v858, 7
        %v860 = vsub.s32 %v221, %v859
        %v861 = vrot.slane %v835, %v860
        %v862 = vlaneseq
        %v863 = vshrl.u32 %v862, 7
        %v864 = vsub.s32 %v221, %v863
        %v865 = vrot.slane %v837, %v864
        %v866 = vlaneseq
        %v867 = vshrl.u32 %v866, 7
        %v868 = vsub.s32 %v221, %v867
        %v869 = vrot.slane %v839, %v868
        %v870 = vlaneseq
        %v871 = vshrl.u32 %v870, 7
        %v872 = vsub.s32 %v221, %v871
        %v873 = vrot.slane %v841, %v872
        %v874 = vlaneseq
        %v875 = vshrl.u32 %v874, 7
        %v876 = vsub.s32 %v221, %v875
        %v877 = vrot.slane %v843, %v876
        %v878 = vlaneseq
        %v879 = vshrl.u32 %v878, 7
        %v880 = vsub.s32 %v221, %v879
        %v881 = vrot.slane %v845, %v880
        %v882 = vlaneseq
        %v883 = vshrl.u32 %v882, 7
        %v884 = vsub.s32 %v221, %v883
        %v885 = vrot.slane %v847, %v884
        %v886 = vlaneseq
        %v887 = vshrl.u32 %v886, 7
        %v888 = vsub.s32 %v221, %v887
        %v889 = vrot.slane %v849, %v888
        %vm890 = vcmask 1041409
        %v891 = vsel %vm890, %v865, %v861
        %vm892 = vcmask 1042434
        %v893 = vsel %vm892, %v869, %v891
        %vm894 = vcmask 1043459
        %v895 = vsel %vm894, %v873, %v893
        %vm896 = vcmask 1044484
        %v897 = vsel %vm896, %v877, %v895
        %vm898 = vcmask 1045509
        %v899 = vsel %vm898, %v881, %v897
        %vm900 = vcmask 1046534
        %v901 = vsel %vm900, %v885, %v899
        %vm902 = vcmask 1047559
        %v903 = vsel %vm902, %v889, %v901
        %v905 = vsel %vm227, %v903, 0.0
        %v906 = vsel %vm530, %v905, 0.0
        %907 = vadd.xlane.f32.xlu0 %v906
        %v908 = vpop.xlane.xlu0 %907
        %v909 = vrot.slane %v908, 4
        %v910 = vadd.f32 %v908, %v909
        %v911 = vrot.slane %v910, 2
        %v912 = vadd.f32 %v910, %v911
        %v913 = vrot.slane %v912, 1
        %v914 = vadd.f32 %v912, %v913
        %s915 = vtos %v914
        %s916 = ssub.f32 %s915, %s549
        %s917 = ssub.s32 %s211, 1
        %s918 = smul.u32 %s211, %s917
        %s919 = scvt.s32.f32 %s918
        %s920 = smax.f32 %s919, 1.0
        %v921 = vstv %s920
        %v922 = vrcp.pop %v921
        %s923 = vtos %v922
        %s924 = smul.f32 %s916, %s923
        %v925 = vstv %s924
        %926 = vst [vmem:[%s196] sm:$0xff] %v925
        %s927 = sand.u32 %s110, 1
        %s928 = scalar_lea.sflag [#allocation6], %s927
        %s929 = sand.u32 %s110, 1
        %s930 = smul.addr %s929, 8
        %s931 = scalar_lea.vmem [#allocation5], %s930
        // Predicated region
        $region45: #{tpu_custom_call.1} parent=31 // pred_check
          %p932 = pneg %p120
        $region46: #{tpu_custom_call.1} parent=31 // pred_check_branch
          %934 = sbr.rel (%p932) target = $region48
        $region47: #{tpu_custom_call.1} parent=31 // pred_region
          %s936 = ssub.s32 128, 128
          %937 = vsyncadd %s928, %s936
          %s938 = smul.addr %s24, 128
          %s939 = scalar_lea.hbm %s4, %s938
          %s941 = sshll.u32 %s931, 4
          %s942 = int_to_ptr.vmem [resolvable:$true] %s941
          %944 = dma.vmem_to_hbm [thread:$0]  %s942, 128, %s939, %s928
        $region48: #{tpu_custom_call.1} parent=31 // pred_fallthru
          _
      $region32: #{tpu_custom_call.1} parent=5 // pred_fallthru
        _
      %p945 = scmp.le.s32.totalorder 2, %s19
      // Predicated region
      $region49: #{tpu_custom_call.1} parent=5 // pred_check
        %p946 = pneg %p945
      $region50: #{tpu_custom_call.1} parent=5 // pred_check_branch
        %948 = sbr.rel (%p946) target = $region52
      $region51: #{tpu_custom_call.1} parent=5 // pred_region
        %s949 = ssub.s32 %s19, 2
        // Predicated region
        $region53: #{tpu_custom_call.1} parent=51 // pred_check
          %p950 = pneg %p126
        $region54: #{tpu_custom_call.1} parent=51 // pred_check_branch
          %952 = sbr.rel (%p950) target = $region56
        $region55: #{tpu_custom_call.1} parent=51 // pred_region
          %s953 = sand.u32 %s111, 1
          %s954 = scalar_lea.sflag [#allocation6], %s953
          %s955 = sand.u32 %s111, 1
          %s956 = smul.addr %s955, 8
          %s957 = scalar_lea.vmem [#allocation5], %s956
          %958 = dma.done %s954, 128
        $region56: #{tpu_custom_call.1} parent=51 // pred_fallthru
          _
      $region52: #{tpu_custom_call.1} parent=5 // pred_fallthru
        _
    $region6: #{tpu_custom_call.1} parent=1 // loop_footer
      %s23 = sadd.s32 1, %s19
    $region7: #{tpu_custom_call.1} parent=1 // loop_footer_branch
      %18 = sbr.rel target = $region3
    $region8: #{tpu_custom_call.1} parent=1 // loop_exit
      _
    %959 = vsyncpa [#allocation6], 1
    %s960 = scalar_lea.sflag [#allocation6], 1
    %961 = vsyncpa %s960, 1

</llo_original>
